<compile_context>
chip_gen: v5e
topology: v5e:2x2
jax: 0.10.0
libtpu: 0.0.40
codegen_flags: <defaults>
</compile_context>

<pallas_src>
import jax
import jax.numpy as jnp
import numpy as np
from jax.experimental import pallas as pl
from jax.experimental.pallas import tpu as pltpu


def _utility_linear_kernel(w_ref, x_ref, o_ref):
    """Fused linear utility.

    w_ref : (R,)   f32 in SMEM  -- utility weights (read as scalars).
    x_ref : (R, N) f32 in VMEM  -- rewards, batch on the lane axis.
    o_ref : (1, N) f32 in VMEM  -- per-sample utilities, lane-dense.
    """
    R = x_ref.shape[0]
    x = x_ref[...]                                            # (R, N)

    # Per-feature min/max over the batch (fresh-module first-call semantics):
    # R tiny cross-lane reductions instead of an N-deep sublane reduce.
    mins = [jnp.min(x[r:r + 1, :]) for r in range(R)]
    maxs = [jnp.max(x[r:r + 1, :]) for r in range(R)]

    # keep_scale=True: one common scale across reward dims (scalar).
    scale = maxs[0] - mins[0]
    for r in range(1, R):
        scale = jnp.maximum(scale, maxs[r] - mins[r])

    # Weighted sum over reward dims: lane-parallel VPU multiply-adds.
    wx = w_ref[0] * x[0:1, :]                                 # (1, N)
    w_sum = w_ref[0]
    w_dot_min = w_ref[0] * ((maxs[0] + mins[0]) * 0.5 - scale * 0.5)
    for r in range(1, R):
        wx = wx + w_ref[r] * x[r:r + 1, :]
        w_sum = w_sum + w_ref[r]
        w_dot_min = w_dot_min + w_ref[r] * ((maxs[r] + mins[r]) * 0.5 - scale * 0.5)

    # Under keep_scale:
    #   max_input - min_input == scale for every feature
    #   => denom     = scale + 1e-5                      (scalar)
    #      min_util  = 0
    #      max_util  = sum(w) * scale / denom            (scalar)
    #      final scaling factor mean(max_input-min_input) == scale
    # so util = (x@w - min_input@w) * c, c a single precomputed scalar.
    denom = scale + 1e-5
    inv_denom = 1.0 / denom                 # scalar reciprocal (hoisted off VPU)
    max_util = w_sum * scale * inv_denom
    inv_norm = 1.0 / (max_util + 1e-6)      # scalar reciprocal (hoisted off VPU)
    c = inv_denom * inv_norm * scale

    o_ref[...] = (wx - w_dot_min) * c


def utility_function_linear(x, weight):
    """x: (N, R) float32 rewards, weight: (R,) float32 -> (N,) float32 utilities."""
    N, R = x.shape
    xt = jnp.asarray(x, jnp.float32).T                        # (R, N): batch on lanes
    w = jnp.asarray(weight, jnp.float32).reshape(R)

    # Single block, no grid: the (R, N) slab is tiny for RL batch sizes and a
    # serial grid loop would only add per-step pipeline overhead.  Only bump
    # the scoped-VMEM limit for unusually large batches (v5e default 16 MiB).
    compiler_params = None
    work_bytes = 4 * (R * N + N) * 2 + (1 << 20)
    if work_bytes > 16 * 1024 * 1024:
        compiler_params = pltpu.CompilerParams(
            vmem_limit_bytes=min(work_bytes, 60 * 1024 * 1024))
    # TODO(synk): the PyTorch module keeps RUNNING min/max buffers across calls
    # and would need a two-pass tiled variant (min/max carried via
    # input_output_aliases) for that stateful behaviour / very large batches;
    # only the documented first-call semantics are implemented here.

    out = pl.pallas_call(
        _utility_linear_kernel,
        out_shape=jax.ShapeDtypeStruct((1, N), jnp.float32),
        in_specs=[
            pl.BlockSpec(memory_space=pltpu.MemorySpace.SMEM),    # weights -> scalars
            pl.BlockSpec((R, N), lambda: (0, 0)),                 # rewards, lane-major
        ],
        out_specs=pl.BlockSpec((1, N), lambda: (0, 0)),           # lane-dense output
        compiler_params=compiler_params,
    )(w, xt)
    return out[0]


def _reference_numpy(x, w):
    x = np.asarray(x, dtype=np.float32)
    w = np.asarray(w, dtype=np.float32)
    min_val = x.min(0)
    max_val = x.max(0)
    scale = (max_val - min_val).max()
    middle = (max_val + min_val) / 2
    min_input = middle - scale / 2
    max_input = middle + scale / 2
    inputs = np.concatenate([[min_input], [max_input], x], 0)
    inputs = (inputs - np.expand_dims(min_input, 0)) / np.expand_dims(
        max_input - min_input + 1e-05, 0)
    utilities = np.sum(inputs * np.expand_dims(w, 0), 1)
    min_util, max_util, util = utilities[0], utilities[1], utilities[2:]
    util = (util - min_util) / (max_util - min_util + 1e-06)
    util *= (max_input - min_input).mean()
    return util


if __name__ == "__main__":
    # Deterministic params: function_choice=1 -> weight [0.8, 0.2]
    reward_shape = 2
    weights_table = jnp.array(
        [[0.9, 0.1], [0.8, 0.2], [0.7, 0.3], [0.5, 0.5], [0.3, 0.7],
         [0.2, 0.8], [0.1, 0.9], [0.98, 0.02], [0.02, 0.98], [0.95, 0.05],
         [0.05, 0.95], [1.0, 0.0], [0.0, 1.0]], dtype=jnp.float32)
    function_choice = 1
    weight = weights_table[function_choice]

    # Small deterministic batch of multi-objective rewards: (batch, reward_shape)
    key = jax.random.PRNGKey(0)
    batch = 8
    x = jax.random.normal(key, (batch, reward_shape), dtype=jnp.float32) * 3.0

    util = utility_function_linear(x, weight)
    util = jax.block_until_ready(util)

    ref = _reference_numpy(np.asarray(x), np.asarray(weight))
    np.testing.assert_allclose(np.asarray(util), ref, rtol=1e-4, atol=1e-5)

    print("KERNEL_OK")
</pallas_src>

<mosaic_0001>
module attributes {stable_mosaic.version = 11 : i64} {
  func.func @_utility_linear_kernel(%arg0: memref<2xf32, #tpu.memory_space<smem>>, %arg1: memref<2x8xf32, #tpu.memory_space<vmem>>, %arg2: memref<1x8xf32, #tpu.memory_space<vmem>>) attributes {dimension_semantics = [], scalar_prefetch = 0 : i64, scratch_operands = 0 : i64, tpu.core_type = #tpu.core_type<tc>} {
    %c0 = arith.constant 0 : index
    %c0_0 = arith.constant 0 : index
    %0 = vector.load %arg1[%c0, %c0_0] : memref<2x8xf32, #tpu.memory_space<vmem>>, vector<2x8xf32>
    %1 = vector.extract_strided_slice %0 {offsets = [0, 0], sizes = [1, 8], strides = [1, 1]} : vector<2x8xf32> to vector<1x8xf32>
    %2 = vector.shape_cast %1 : vector<1x8xf32> to vector<1x1x8xf32>
    %cst = arith.constant dense<0x7F800000> : vector<1xf32>
    %3 = vector.multi_reduction <minimumf>, %2, %cst [1, 2] : vector<1x1x8xf32> to vector<1xf32>
    %4 = vector.shape_cast %3 : vector<1xf32> to vector<1x1x1xf32>
    %5 = vector.extract %4[0, 0, 0] : f32 from vector<1x1x1xf32>
    %6 = vector.extract_strided_slice %0 {offsets = [1, 0], sizes = [1, 8], strides = [1, 1]} : vector<2x8xf32> to vector<1x8xf32>
    %7 = vector.shape_cast %6 : vector<1x8xf32> to vector<1x1x8xf32>
    %cst_1 = arith.constant dense<0x7F800000> : vector<1xf32>
    %8 = vector.multi_reduction <minimumf>, %7, %cst_1 [1, 2] : vector<1x1x8xf32> to vector<1xf32>
    %9 = vector.shape_cast %8 : vector<1xf32> to vector<1x1x1xf32>
    %10 = vector.extract %9[0, 0, 0] : f32 from vector<1x1x1xf32>
    %11 = vector.extract_strided_slice %0 {offsets = [0, 0], sizes = [1, 8], strides = [1, 1]} : vector<2x8xf32> to vector<1x8xf32>
    %12 = vector.shape_cast %11 : vector<1x8xf32> to vector<1x1x8xf32>
    %cst_2 = arith.constant dense<0xFF800000> : vector<1xf32>
    %13 = vector.multi_reduction <maximumf>, %12, %cst_2 [1, 2] : vector<1x1x8xf32> to vector<1xf32>
    %14 = vector.shape_cast %13 : vector<1xf32> to vector<1x1x1xf32>
    %15 = vector.extract %14[0, 0, 0] : f32 from vector<1x1x1xf32>
    %16 = vector.extract_strided_slice %0 {offsets = [1, 0], sizes = [1, 8], strides = [1, 1]} : vector<2x8xf32> to vector<1x8xf32>
    %17 = vector.shape_cast %16 : vector<1x8xf32> to vector<1x1x8xf32>
    %cst_3 = arith.constant dense<0xFF800000> : vector<1xf32>
    %18 = vector.multi_reduction <maximumf>, %17, %cst_3 [1, 2] : vector<1x1x8xf32> to vector<1xf32>
    %19 = vector.shape_cast %18 : vector<1xf32> to vector<1x1x1xf32>
    %20 = vector.extract %19[0, 0, 0] : f32 from vector<1x1x1xf32>
    %21 = arith.subf %15, %5 : f32
    %22 = arith.subf %20, %10 : f32
    %23 = arith.maximumf %21, %22 : f32
    %c0_4 = arith.constant 0 : index
    %24 = memref.load %arg0[%c0_4] : memref<2xf32, #tpu.memory_space<smem>>
    %25 = vector.extract_strided_slice %0 {offsets = [0, 0], sizes = [1, 8], strides = [1, 1]} : vector<2x8xf32> to vector<1x8xf32>
    %26 = vector.broadcast %24 : f32 to vector<1x8xf32>
    %27 = arith.mulf %26, %25 : vector<1x8xf32>
    %c0_5 = arith.constant 0 : index
    %28 = memref.load %arg0[%c0_5] : memref<2xf32, #tpu.memory_space<smem>>
    %c0_6 = arith.constant 0 : index
    %29 = memref.load %arg0[%c0_6] : memref<2xf32, #tpu.memory_space<smem>>
    %30 = arith.addf %15, %5 : f32
    %cst_7 = arith.constant 5.000000e-01 : f32
    %31 = arith.mulf %30, %cst_7 : f32
    %cst_8 = arith.constant 5.000000e-01 : f32
    %32 = arith.mulf %23, %cst_8 : f32
    %33 = arith.subf %31, %32 : f32
    %34 = arith.mulf %29, %33 : f32
    %c1 = arith.constant 1 : index
    %35 = memref.load %arg0[%c1] : memref<2xf32, #tpu.memory_space<smem>>
    %36 = vector.extract_strided_slice %0 {offsets = [1, 0], sizes = [1, 8], strides = [1, 1]} : vector<2x8xf32> to vector<1x8xf32>
    %37 = vector.broadcast %35 : f32 to vector<1x8xf32>
    %38 = arith.mulf %37, %36 : vector<1x8xf32>
    %39 = arith.addf %27, %38 : vector<1x8xf32>
    %c1_9 = arith.constant 1 : index
    %40 = memref.load %arg0[%c1_9] : memref<2xf32, #tpu.memory_space<smem>>
    %41 = arith.addf %28, %40 : f32
    %c1_10 = arith.constant 1 : index
    %42 = memref.load %arg0[%c1_10] : memref<2xf32, #tpu.memory_space<smem>>
    %43 = arith.addf %20, %10 : f32
    %cst_11 = arith.constant 5.000000e-01 : f32
    %44 = arith.mulf %43, %cst_11 : f32
    %cst_12 = arith.constant 5.000000e-01 : f32
    %45 = arith.mulf %23, %cst_12 : f32
    %46 = arith.subf %44, %45 : f32
    %47 = arith.mulf %42, %46 : f32
    %48 = arith.addf %34, %47 : f32
    %cst_13 = arith.constant 9.99999974E-6 : f32
    %49 = arith.addf %23, %cst_13 : f32
    %cst_14 = arith.constant 1.000000e+00 : f32
    %50 = arith.divf %cst_14, %49 : f32
    %51 = arith.mulf %41, %23 : f32
    %52 = arith.mulf %51, %50 : f32
    %cst_15 = arith.constant 9.99999997E-7 : f32
    %53 = arith.addf %52, %cst_15 : f32
    %cst_16 = arith.constant 1.000000e+00 : f32
    %54 = arith.divf %cst_16, %53 : f32
    %55 = arith.mulf %50, %54 : f32
    %56 = arith.mulf %55, %23 : f32
    %57 = vector.broadcast %48 : f32 to vector<1x8xf32>
    %58 = arith.subf %39, %57 : vector<1x8xf32>
    %59 = vector.broadcast %56 : f32 to vector<1x8xf32>
    %60 = arith.mulf %58, %59 : vector<1x8xf32>
    %c0_17 = arith.constant 0 : index
    %c0_18 = arith.constant 0 : index
    %61 = vector.load %arg2[%c0_17, %c0_18] : memref<1x8xf32, #tpu.memory_space<vmem>>, vector<1x8xf32>
    tpu.vector_store %arg2[%c0_17, %c0_18], %60 {strides = array<i32>} : memref<1x8xf32, #tpu.memory_space<vmem>>, vector<1x8xf32>,
    return
  }
}

</mosaic_0001>

<llo_original>
// kernel: tpu_custom_call.1
$region0: #{tpu_custom_call.1}
  #allocation0 [shape = 'u32[]', space=smem, size = 0x4, offset = 0x4, fixed_abs, tag = 'smem constant byte address 0x4 - core index']
  #allocation1 [shape = 'u32[72,128]{1,0:T(1,128)}', space=vmem, size = 0x9000, scoped, tag = 'internal scratch']
  %s0 = inlined_call_operand.hbm [shape: f32[2], index: 0, kind: input, shape index: {}]
  %s1 = inlined_call_operand.hbm [shape: f32[2,8], index: 1, kind: input, shape index: {}]
  %s2 = inlined_call_operand.hbm [shape: f32[1,8], index: 2, kind: output, shape index: {}]
  %s3 = sld [smem:[#allocation0]]
  $region26: #{tpu_custom_call.1} parent=0
    _
  %s5 = ssub.s32 1, %s3
  %s6 = scalar_select 0, %s5, %s3
  $region1: #{tpu_custom_call.1} parent=0
    #allocation2 [shape = 'u8[512]{0}', space=smem, size = 0x200, scoped, tag = 'input window, operand 0, single buffered']
    #allocation3 [shape = 's32[1]{0}', space=sflag, size = 0x4, scoped, tag = 'scoped memory for tpu_custom_call.1']
    #allocation4 [shape = 's32[1]{0}', space=sflag, size = 0x4, scoped, tag = 'scoped memory for tpu_custom_call.1']
    #allocation5 [shape = 's32[1]{0}', space=sflag, size = 0x4, scoped, tag = 'scoped memory for tpu_custom_call.1']
    #allocation6 [shape = 'u8[1024]{0}', space=vmem, size = 0x400, scoped, tag = 'input window, operand 1, single buffered']
    #allocation7 [shape = 'u8[512]{0}', space=vmem, size = 0x400, scoped, tag = 'output window, operand 0, single buffered']
    %7 = vsyncpa [#allocation5], 0
    %8 = vsyncpa [#allocation3], 0
    %9 = vsyncpa [#allocation4], 0
    // Predicated region
    $region2: #{tpu_custom_call.1} parent=1 // pred_check
      _
    $region3: #{tpu_custom_call.1} parent=1 // pred_check_branch
      %11 = sbr.rel (0) target = $region5
    $region4: #{tpu_custom_call.1} parent=1 // pred_region
      %13 = vsyncadd [#allocation5], 0
      %s15 = sshll.u32 %s0, 4
      %s16 = int_to_ptr.hbm [resolvable:$true] %s15
      %18 = dma.hbm_to_smem %s16, 16, [#allocation2], [#allocation5]
    $region5: #{tpu_custom_call.1} parent=1 // pred_fallthru
      _
    // Predicated region
    $region6: #{tpu_custom_call.1} parent=1 // pred_check
      _
    $region7: #{tpu_custom_call.1} parent=1 // pred_check_branch
      %20 = sbr.rel (0) target = $region9
    $region8: #{tpu_custom_call.1} parent=1 // pred_region
      %22 = vsyncadd [#allocation3], 0
      %s24 = sshll.u32 %s1, 4
      %s25 = int_to_ptr.hbm [resolvable:$true] %s24
      %s26 = sshll.u32 [#allocation6], 4
      %s27 = int_to_ptr.vmem [resolvable:$true] %s26
      %29 = dma.hbm_to_vmem [thread:$0]  %s25, 32, %s27, [#allocation3]
    $region9: #{tpu_custom_call.1} parent=1 // pred_fallthru
      _
    // Predicated region
    $region10: #{tpu_custom_call.1} parent=1 // pred_check
      _
    $region11: #{tpu_custom_call.1} parent=1 // pred_check_branch
      %31 = sbr.rel (0) target = $region13
    $region12: #{tpu_custom_call.1} parent=1 // pred_region
      %33 = dma.done [#allocation5], 16
    $region13: #{tpu_custom_call.1} parent=1 // pred_fallthru
      _
    // Predicated region
    $region14: #{tpu_custom_call.1} parent=1 // pred_check
      _
    $region15: #{tpu_custom_call.1} parent=1 // pred_check_branch
      %35 = sbr.rel (0) target = $region17
    $region16: #{tpu_custom_call.1} parent=1 // pred_region
      %37 = dma.done [#allocation3], 32
    $region17: #{tpu_custom_call.1} parent=1 // pred_fallthru
      _
    %38 = sfence
    %v39 = vld [vmem:[#allocation6] sm:$0x3]
    %vm40 = vcmask 57344
    %v41 = vsel %vm40, %v39, inf
    %42 = vmin.xlane.f32.xlu0 %v41
    %v43 = vpop.xlane.xlu0 %42
    %v44 = vrot.slane %v43, 4
    %v45 = vmin.f32 %v43, %v44
    %v46 = vrot.slane %v45, 2
    %v47 = vmin.f32 %v45, %v46
    %v48 = vrot.slane %v47, 1
    %v49 = vmin.f32 %v47, %v48
    %s50 = vtos %v49
    %vm51 = vcmask 58369
    %v52 = vsel %vm51, %v39, inf
    %53 = vmin.xlane.f32.xlu0 %v52
    %v54 = vpop.xlane.xlu0 %53
    %v55 = vrot.slane %v54, 4
    %v56 = vmin.f32 %v54, %v55
    %v57 = vrot.slane %v56, 2
    %v58 = vmin.f32 %v56, %v57
    %v59 = vrot.slane %v58, 1
    %v60 = vmin.f32 %v58, %v59
    %s61 = vtos %v60
    %v62 = vsel %vm40, %v39, -inf
    %63 = vmax.xlane.f32.xlu0 %v62
    %v64 = vpop.xlane.xlu0 %63
    %v65 = vrot.slane %v64, 4
    %v66 = vmax.f32 %v64, %v65
    %v67 = vrot.slane %v66, 2
    %v68 = vmax.f32 %v66, %v67
    %v69 = vrot.slane %v68, 1
    %v70 = vmax.f32 %v68, %v69
    %s71 = vtos %v70
    %v72 = vsel %vm51, %v39, -inf
    %73 = vmax.xlane.f32.xlu0 %v72
    %v74 = vpop.xlane.xlu0 %73
    %v75 = vrot.slane %v74, 4
    %v76 = vmax.f32 %v74, %v75
    %v77 = vrot.slane %v76, 2
    %v78 = vmax.f32 %v76, %v77
    %v79 = vrot.slane %v78, 1
    %v80 = vmax.f32 %v78, %v79
    %s81 = vtos %v80
    %s82 = ssub.f32 %s71, %s50
    %s83 = ssub.f32 %s81, %s61
    %s84 = smax.f32 %s82, %s83
    %s85 = sld [smem:[#allocation2]]
    %v86 = vstv %s85
    %v87 = vmul.f32 %v86, %v39
    %s88 = sadd.f32 %s71, %s50
    %s89 = smul.f32 %s88, 0.5
    %s90 = smul.f32 %s84, 0.5
    %s91 = ssub.f32 %s89, %s90
    %s92 = smul.f32 %s85, %s91
    %s93 = sld [smem:[#allocation2 + $0x1]]
    %v94 = vstv %s93
    %v95 = vmul.f32 %v94, %v39
    %v97 = vrot.slane %v95, 1
    %v99 = vadd.f32 %v87, %v97
    %s100 = sadd.f32 %s85, %s93
    %s101 = sadd.f32 %s81, %s61
    %s102 = smul.f32 %s101, 0.5
    %s103 = ssub.f32 %s102, %s90
    %s104 = smul.f32 %s93, %s103
    %s105 = sadd.f32 %s92, %s104
    %s106 = sadd.f32 %s84, 1e-05
    %v107 = vstv %s106
    %v108 = vrcp.pop %v107
    %v109 = vmul.f32 %v107, %v108
    %v110 = vsub.f32 1.0, %v109
    %v111 = vmul.f32 %v108, %v110
    %v112 = vadd.f32 %v108, %v111
    %vm113 = vweird.f32 %v107
    %vm114 = vweird.f32 %v108
    %vm115 = vmor %vm113, %vm114
    %v116 = vsel %vm115, %v108, %v112
    %v117 = vand.u32 2147483647, %v107
    %vm118 = vcmp.eq.f32.partialorder %v117, 8.507059e+37
    %v119 = vand.u32 %v107, 2147483648
    %v120 = vor.u32 1.1754944e-38, %v119
    %v121 = vsel %vm118, %v120, %v116
    %s122 = vtos %v121
    %s123 = smul.f32 %s100, %s84
    %s124 = smul.f32 %s123, %s122
    %s125 = sadd.f32 %s124, 1e-06
    %v126 = vstv %s125
    %v127 = vrcp.pop %v126
    %v128 = vmul.f32 %v126, %v127
    %v129 = vsub.f32 1.0, %v128
    %v130 = vmul.f32 %v127, %v129
    %v131 = vadd.f32 %v127, %v130
    %vm132 = vweird.f32 %v126
    %vm133 = vweird.f32 %v127
    %vm134 = vmor %vm132, %vm133
    %v135 = vsel %vm134, %v127, %v131
    %v136 = vand.u32 2147483647, %v126
    %vm137 = vcmp.eq.f32.partialorder %v136, 8.507059e+37
    %v138 = vand.u32 %v126, 2147483648
    %v139 = vor.u32 1.1754944e-38, %v138
    %v140 = vsel %vm137, %v139, %v135
    %s141 = vtos %v140
    %s142 = smul.f32 %s122, %s141
    %s143 = smul.f32 %s142, %s84
    %v144 = vstv %s105
    %v145 = vsub.f32 %v99, %v144
    %v146 = vstv %s143
    %v147 = vmul.f32 %v145, %v146
    %148 = vst.msk [vmem:[#allocation7] sm:$0x1] %vm40, %v147
    // Predicated region
    $region18: #{tpu_custom_call.1} parent=1 // pred_check
      _
    $region19: #{tpu_custom_call.1} parent=1 // pred_check_branch
      %150 = sbr.rel (0) target = $region21
    $region20: #{tpu_custom_call.1} parent=1 // pred_region
      %152 = vsyncadd [#allocation4], 0
      %s154 = sshll.u32 [#allocation7], 4
      %s155 = int_to_ptr.vmem [resolvable:$true] %s154
      %s156 = sshll.u32 %s2, 4
      %s157 = int_to_ptr.hbm [resolvable:$true] %s156
      %159 = dma.vmem_to_hbm [thread:$0]  %s155, 16, %s157, [#allocation4]
    $region21: #{tpu_custom_call.1} parent=1 // pred_fallthru
      _
    // Predicated region
    $region22: #{tpu_custom_call.1} parent=1 // pred_check
      _
    $region23: #{tpu_custom_call.1} parent=1 // pred_check_branch
      %161 = sbr.rel (0) target = $region25
    $region24: #{tpu_custom_call.1} parent=1 // pred_region
      %163 = dma.done [#allocation4], 16
    $region25: #{tpu_custom_call.1} parent=1 // pred_fallthru
      _
    %164 = vsyncpa [#allocation3], 1
    %165 = vsyncpa [#allocation4], 1
    %166 = vsyncpa [#allocation5], 1

</llo_original>
